<compile_context>
chip_gen: v7x
topology: tpu7x:2x2x1
jax: 0.10.0
libtpu: 0.0.40
codegen_flags: <defaults>
</compile_context>

<pallas_src>
import jax
import jax.numpy as jnp
import numpy as np
from jax.experimental import pallas as pl
from jax.experimental.pallas import tpu as pltpu

BN_EPS = 1e-5
LANE = 128
VMEM_LIMIT = 32 * 1024 * 1024        # explicit scoped-VMEM budget; safe on v5e/v6e/v7x
FUSED_VMEM_BUDGET = 12 * 1024 * 1024  # conservative: use fused path only well under limit


def _round_up(n, m):
    return ((n + m - 1) // m) * m


# ---------------------------------------------------------------------------
# Fully fused single-call kernel (whole batch resident in VMEM)
# ---------------------------------------------------------------------------

def _fused_kernel(n_hidden, bsz, eps):
    """x -> [Linear -> ReLU -> BatchNorm1d]*n_hidden -> Linear, in one body."""

    def kernel(*refs):
        # refs: x, (W_i, b_i, gb_i) * n_hidden, W_last, b_last, out
        x_ref = refs[0]
        idx = 1
        inv_n = 1.0 / float(bsz)

        h = x_ref[...].astype(jnp.float32)
        for _ in range(n_hidden):
            w_ref, b_ref, gb_ref = refs[idx], refs[idx + 1], refs[idx + 2]
            idx += 3
            pre = jnp.dot(h.astype(jnp.bfloat16), w_ref[...],
                          preferred_element_type=jnp.float32)
            a = jnp.maximum(pre + b_ref[...], 0.0)

            # Mask batch-padding rows out of the BatchNorm statistics.
            row = jax.lax.broadcasted_iota(jnp.int32, a.shape, 0)
            av = jnp.where(row < bsz, a, 0.0)
            mean = jnp.sum(av, axis=0, keepdims=True) * inv_n
            var = jnp.maximum(
                jnp.sum(av * av, axis=0, keepdims=True) * inv_n - mean * mean, 0.0)
            scale = gb_ref[0:1, :] * jax.lax.rsqrt(var + eps)
            shift = gb_ref[1:2, :] - mean * scale
            h = a * scale + shift

        w_ref, b_ref, out_ref = refs[idx], refs[idx + 1], refs[idx + 2]
        logit = jnp.dot(h.astype(jnp.bfloat16), w_ref[...],
                        preferred_element_type=jnp.float32) + b_ref[...]
        out_ref[...] = logit.astype(out_ref.dtype)

    return kernel


# ---------------------------------------------------------------------------
# Batch-tiled stage kernels (fallback for large batches)
# ---------------------------------------------------------------------------

def _first_layer_kernel(bsz, tb):
    """Linear + ReLU + masked per-feature sum/sumsq accumulation."""

    def kernel(x_ref, w_ref, b_ref, a_ref, stats_ref):
        i = pl.program_id(0)

        @pl.when(i == 0)
        def _():
            stats_ref[...] = jnp.zeros_like(stats_ref)

        x = x_ref[...].astype(jnp.bfloat16)
        pre = jnp.dot(x, w_ref[...], preferred_element_type=jnp.float32)
        a = jnp.maximum(pre + b_ref[...], 0.0)

        row = jax.lax.broadcasted_iota(jnp.int32, a.shape, 0) + i * tb
        av = jnp.where(row < bsz, a, 0.0)
        stats_ref[...] += jnp.concatenate(
            [jnp.sum(av, axis=0, keepdims=True),
             jnp.sum(av * av, axis=0, keepdims=True)], axis=0)

        a_ref[...] = a.astype(a_ref.dtype)

    return kernel


def _mid_layer_kernel(bsz, tb, eps):
    """Fold previous layer's BN into scale/shift, apply, Linear + ReLU + stats."""

    def kernel(a_prev_ref, stats_prev_ref, gb_prev_ref, w_ref, b_ref,
               a_ref, stats_ref):
        i = pl.program_id(0)

        @pl.when(i == 0)
        def _():
            stats_ref[...] = jnp.zeros_like(stats_ref)

        inv_n = 1.0 / float(bsz)
        mean = stats_prev_ref[0:1, :] * inv_n
        var = jnp.maximum(stats_prev_ref[1:2, :] * inv_n - mean * mean, 0.0)
        scale = gb_prev_ref[0:1, :] * jax.lax.rsqrt(var + eps)
        shift = gb_prev_ref[1:2, :] - mean * scale

        h = a_prev_ref[...].astype(jnp.float32) * scale + shift
        pre = jnp.dot(h.astype(jnp.bfloat16), w_ref[...],
                      preferred_element_type=jnp.float32)
        a = jnp.maximum(pre + b_ref[...], 0.0)

        row = jax.lax.broadcasted_iota(jnp.int32, a.shape, 0) + i * tb
        av = jnp.where(row < bsz, a, 0.0)
        stats_ref[...] += jnp.concatenate(
            [jnp.sum(av, axis=0, keepdims=True),
             jnp.sum(av * av, axis=0, keepdims=True)], axis=0)

        a_ref[...] = a.astype(a_ref.dtype)

    return kernel


def _final_layer_kernel(bsz, eps):
    """Fold last hidden layer's BN into scale/shift, apply, final Linear."""

    def kernel(a_prev_ref, stats_prev_ref, gb_prev_ref, w_ref, b_ref, out_ref):
        inv_n = 1.0 / float(bsz)
        mean = stats_prev_ref[0:1, :] * inv_n
        var = jnp.maximum(stats_prev_ref[1:2, :] * inv_n - mean * mean, 0.0)
        scale = gb_prev_ref[0:1, :] * jax.lax.rsqrt(var + eps)
        shift = gb_prev_ref[1:2, :] - mean * scale

        h = a_prev_ref[...].astype(jnp.float32) * scale + shift
        logit = jnp.dot(h.astype(jnp.bfloat16), w_ref[...],
                        preferred_element_type=jnp.float32) + b_ref[...]
        out_ref[...] = logit.astype(out_ref.dtype)

    return kernel


# ---------------------------------------------------------------------------
# Parameter packing (lane padding + bf16 weights)
# ---------------------------------------------------------------------------

def _pack_params(params, in_dim, out_dim):
    in_p = _round_up(in_dim, LANE)
    out_p = _round_up(out_dim, LANE)

    layers = []
    cur_p = in_p
    for (w, b, g, be) in params[:-1]:
        d_in, h = w.shape
        hp = _round_up(h, LANE)
        w_pad = jnp.zeros((cur_p, hp), jnp.bfloat16).at[:d_in, :h].set(
            w.astype(jnp.bfloat16))
        b_pad = jnp.zeros((1, hp), jnp.float32).at[:, :h].set(b.reshape(1, -1))
        gb_pad = (jnp.zeros((2, hp), jnp.float32)
                  .at[0, :h].set(g.reshape(-1))
                  .at[1, :h].set(be.reshape(-1)))
        layers.append((w_pad, b_pad, gb_pad, hp))
        cur_p = hp

    w_last, b_last = params[-1]
    wl_pad = jnp.zeros((cur_p, out_p), jnp.bfloat16).at[
        :w_last.shape[0], :out_dim].set(w_last.astype(jnp.bfloat16))
    bl_pad = jnp.zeros((1, out_p), jnp.float32).at[:, :out_dim].set(
        b_last.reshape(1, -1))
    return in_p, out_p, layers, wl_pad, bl_pad


def _fused_vmem_bytes(bsz_p, in_p, out_p, layers):
    total = bsz_p * in_p * 4                       # input
    cur = in_p
    for (_, _, _, hp) in layers:
        total += cur * hp * 2 + hp * 4 * 3         # W (bf16) + b + gamma/beta
        total += bsz_p * hp * 4 * 2                # activation temporaries (generous)
        cur = hp
    total += cur * out_p * 2 + out_p * 4           # last W + b
    total += bsz_p * out_p * 4                     # output
    return total


# ---------------------------------------------------------------------------
# Forward wrapper
# ---------------------------------------------------------------------------

def dnn2_forward(x, params, out_dim, *, tb=256, force_tiled=False):
    """params: [(W(in,h), b(1,h), gamma(1,h), beta(1,h)), ...] for hidden
    layers, then (W_last(in,out_dim), b_last(1,out_dim)).  All f32,
    PyTorch-equivalent values; padding / bf16 conversion happens here."""
    bsz, in_dim = x.shape
    n_hidden = len(params) - 1
    assert n_hidden >= 1

    in_p, out_p, layers, wl_pad, bl_pad = _pack_params(params, in_dim, out_dim)

    # ------------------------ fully fused fast path ------------------------
    bsz_f = _round_up(bsz, 16)
    if (not force_tiled and
            _fused_vmem_bytes(bsz_f, in_p, out_p, layers) <= FUSED_VMEM_BUDGET):
        x_pad = jnp.zeros((bsz_f, in_p), jnp.float32).at[:bsz, :in_dim].set(
            x.astype(jnp.float32))
        args = [x_pad]
        for (w_p, b_p, gb_p, _) in layers:
            args += [w_p, b_p, gb_p]
        args += [wl_pad, bl_pad]
        logits_pad = pl.pallas_call(
            _fused_kernel(n_hidden, bsz, BN_EPS),
            out_shape=jax.ShapeDtypeStruct((bsz_f, out_p), jnp.float32),
            compiler_params=pltpu.CompilerParams(vmem_limit_bytes=VMEM_LIMIT),
        )(*args)
        return logits_pad[:bsz, :out_dim]

    # ------------------------ batch-tiled fallback -------------------------
    tb = max(16, min(tb, _round_up(bsz, 16)))
    tb = _round_up(tb, 16)
    bsz_p = _round_up(bsz, tb)
    n_tiles = bsz_p // tb

    x_pad = jnp.zeros((bsz_p, in_p), jnp.float32).at[:bsz, :in_dim].set(
        x.astype(jnp.float32))

    acc_params = pltpu.CompilerParams(
        dimension_semantics=("arbitrary",),     # cross-tile stats accumulator
        vmem_limit_bytes=VMEM_LIMIT)
    par_params = pltpu.CompilerParams(
        dimension_semantics=("parallel",),      # no cross-tile state
        vmem_limit_bytes=VMEM_LIMIT)

    # Stage 0: Linear + ReLU + stats.
    w0, b0, gb0, h0p = layers[0]
    a_prev, stats_prev = pl.pallas_call(
        _first_layer_kernel(bsz, tb),
        out_shape=(jax.ShapeDtypeStruct((bsz_p, h0p), jnp.bfloat16),
                   jax.ShapeDtypeStruct((2, h0p), jnp.float32)),
        grid=(n_tiles,),
        in_specs=[pl.BlockSpec((tb, in_p), lambda i: (i, 0)),
                  pl.BlockSpec((in_p, h0p), lambda i: (0, 0)),
                  pl.BlockSpec((1, h0p), lambda i: (0, 0))],
        out_specs=[pl.BlockSpec((tb, h0p), lambda i: (i, 0)),
                   pl.BlockSpec((2, h0p), lambda i: (0, 0))],
        compiler_params=acc_params,
    )(x_pad, w0, b0)
    gb_prev, hprev_p = gb0, h0p

    # Middle stages: BN(prev) + Linear + ReLU + stats.
    for s in range(1, n_hidden):
        w_s, b_s, gb_s, hsp = layers[s]
        a_prev, stats_prev = pl.pallas_call(
            _mid_layer_kernel(bsz, tb, BN_EPS),
            out_shape=(jax.ShapeDtypeStruct((bsz_p, hsp), jnp.bfloat16),
                       jax.ShapeDtypeStruct((2, hsp), jnp.float32)),
            grid=(n_tiles,),
            in_specs=[pl.BlockSpec((tb, hprev_p), lambda i: (i, 0)),
                      pl.BlockSpec((2, hprev_p), lambda i: (0, 0)),
                      pl.BlockSpec((2, hprev_p), lambda i: (0, 0)),
                      pl.BlockSpec((hprev_p, hsp), lambda i: (0, 0)),
                      pl.BlockSpec((1, hsp), lambda i: (0, 0))],
            out_specs=[pl.BlockSpec((tb, hsp), lambda i: (i, 0)),
                       pl.BlockSpec((2, hsp), lambda i: (0, 0))],
            compiler_params=acc_params,
        )(a_prev, stats_prev, gb_prev, w_s, b_s)
        gb_prev, hprev_p = gb_s, hsp

    # Final stage: BN(last hidden) + Linear, lane-dense (128-padded) output.
    logits_pad = pl.pallas_call(
        _final_layer_kernel(bsz, BN_EPS),
        out_shape=jax.ShapeDtypeStruct((bsz_p, out_p), jnp.float32),
        grid=(n_tiles,),
        in_specs=[pl.BlockSpec((tb, hprev_p), lambda i: (i, 0)),
                  pl.BlockSpec((2, hprev_p), lambda i: (0, 0)),
                  pl.BlockSpec((2, hprev_p), lambda i: (0, 0)),
                  pl.BlockSpec((hprev_p, out_p), lambda i: (0, 0)),
                  pl.BlockSpec((1, out_p), lambda i: (0, 0))],
        out_specs=pl.BlockSpec((tb, out_p), lambda i: (i, 0)),
        compiler_params=par_params,
    )(a_prev, stats_prev, gb_prev, wl_pad, bl_pad)

    return logits_pad[:bsz, :out_dim]


# ---------------------------------------------------------------------------
# Init (PyTorch-equivalent) and references
# ---------------------------------------------------------------------------

def _xavier_uniform(key, fan_in, fan_out, gain):
    bound = gain * np.sqrt(6.0 / (fan_in + fan_out))
    # PyTorch stores Linear weight as (out, in); generate that way, transpose
    # to (in, out) for the kernel's h @ W layout.
    w = jax.random.uniform(key, (fan_out, fan_in), jnp.float32, -bound, bound)
    return w.T


def init_dnn2_params(key, in_dim, hidden_dims, out_dim):
    params = []
    relu_gain = float(np.sqrt(2.0))   # nn.init.calculate_gain('relu')
    cur = in_dim
    for h in hidden_dims:
        key, kw, kb = jax.random.split(key, 3)
        w = _xavier_uniform(kw, cur, h, relu_gain)
        bb = 1.0 / np.sqrt(cur)
        b = jax.random.uniform(kb, (1, h), jnp.float32, -bb, bb)
        gamma = jnp.ones((1, h), jnp.float32)
        beta = jnp.zeros((1, h), jnp.float32)
        params.append((w, b, gamma, beta))
        cur = h
    key, kw, kb = jax.random.split(key, 3)
    w_last = _xavier_uniform(kw, cur, out_dim, 1.0)
    bb = 1.0 / np.sqrt(cur)
    b_last = jax.random.uniform(kb, (1, out_dim), jnp.float32, -bb, bb)
    params.append((w_last, b_last))
    return params


def dnn2_reference_f32(x, params):
    """Pure-JAX f32 reference of the module forward (training-mode BatchNorm)."""
    h = x.astype(jnp.float32)
    for (w, b, g, beta) in params[:-1]:
        h = jnp.maximum(h @ w + b, 0.0)
        mean = jnp.mean(h, axis=0, keepdims=True)
        var = jnp.mean((h - mean) ** 2, axis=0, keepdims=True)
        h = (h - mean) * jax.lax.rsqrt(var + BN_EPS) * g + beta
    w_last, b_last = params[-1]
    return h @ w_last + b_last


def dnn2_reference_matched(x, params, *, act_bf16_roundtrip):
    """Same forward with the kernel's precision choices: bf16 matmul operands,
    f32 accumulation and f32 BN math.  `act_bf16_roundtrip=True` matches the
    tiled path (activations stored bf16 between pallas_calls)."""
    bf = jnp.bfloat16
    h = x.astype(jnp.float32)
    for (w, b, g, beta) in params[:-1]:
        a = jnp.dot(h.astype(bf), w.astype(bf),
                    preferred_element_type=jnp.float32)
        a = jnp.maximum(a + b, 0.0)
        mean = jnp.mean(a, axis=0, keepdims=True)
        var = jnp.mean((a - mean) ** 2, axis=0, keepdims=True)
        scale = g * jax.lax.rsqrt(var + BN_EPS)
        shift = beta - mean * scale
        a_in = a.astype(bf).astype(jnp.float32) if act_bf16_roundtrip else a
        h = a_in * scale + shift
    w_last, b_last = params[-1]
    return jnp.dot(h.astype(bf), w_last.astype(bf),
                   preferred_element_type=jnp.float32) + b_last


if __name__ == "__main__":
    in_dim, hidden_dims, out_dim = 32, (64, 32), 1
    bsz = 50   # not a tile multiple -> exercises BN row masking

    key = jax.random.PRNGKey(0)
    key, kx = jax.random.split(key)
    x = jax.random.normal(kx, (bsz, in_dim), jnp.float32)
    params = init_dnn2_params(key, in_dim, hidden_dims, out_dim)

    # Path 1: fully fused single pallas_call (auto-selected for small problems).
    logit_fused = jax.block_until_ready(dnn2_forward(x, params, out_dim))
    assert logit_fused.shape == (bsz, out_dim), logit_fused.shape
    ref_fused = jax.block_until_ready(
        dnn2_reference_matched(x, params, act_bf16_roundtrip=False))
    np.testing.assert_allclose(np.asarray(logit_fused), np.asarray(ref_fused),
                               rtol=5e-3, atol=5e-3)

    # Path 2: batch-tiled multi-call fallback (forced; tb=32 -> 2 batch tiles,
    # exercising the cross-tile BN stats accumulator).
    logit_tiled = jax.block_until_ready(
        dnn2_forward(x, params, out_dim, tb=32, force_tiled=True))
    assert logit_tiled.shape == (bsz, out_dim), logit_tiled.shape
    ref_tiled = jax.block_until_ready(
        dnn2_reference_matched(x, params, act_bf16_roundtrip=True))
    np.testing.assert_allclose(np.asarray(logit_tiled), np.asarray(ref_tiled),
                               rtol=5e-3, atol=5e-3)

    # Sanity check vs. the full-f32 module semantics (bf16 MXU operands are an
    # intentional precision tradeoff, so only a loose bound is asserted).
    ref32 = jax.block_until_ready(dnn2_reference_f32(x, params))
    assert float(jnp.max(jnp.abs(logit_fused - ref32))) < 0.5
    assert float(jnp.max(jnp.abs(logit_tiled - ref32))) < 0.5

    print("KERNEL_OK")
</pallas_src>

<mosaic_0001>
module attributes {stable_mosaic.version = 11 : i64} {
  func.func @kernel(%arg0: memref<64x128xf32, #tpu.memory_space<vmem>>, %arg1: memref<128x128xbf16, #tpu.memory_space<vmem>>, %arg2: memref<1x128xf32, #tpu.memory_space<vmem>>, %arg3: memref<2x128xf32, #tpu.memory_space<vmem>>, %arg4: memref<128x128xbf16, #tpu.memory_space<vmem>>, %arg5: memref<1x128xf32, #tpu.memory_space<vmem>>, %arg6: memref<2x128xf32, #tpu.memory_space<vmem>>, %arg7: memref<128x128xbf16, #tpu.memory_space<vmem>>, %arg8: memref<1x128xf32, #tpu.memory_space<vmem>>, %arg9: memref<64x128xf32, #tpu.memory_space<vmem>>) attributes {dimension_semantics = [], scalar_prefetch = 0 : i64, scratch_operands = 0 : i64, tpu.core_type = #tpu.core_type<tc>} {
    %c0 = arith.constant 0 : index
    %c0_0 = arith.constant 0 : index
    %0 = vector.load %arg0[%c0, %c0_0] : memref<64x128xf32, #tpu.memory_space<vmem>>, vector<64x128xf32>
    %1 = arith.truncf %0 : vector<64x128xf32> to vector<64x128xbf16>
    %c0_1 = arith.constant 0 : index
    %c0_2 = arith.constant 0 : index
    %2 = vector.load %arg1[%c0_1, %c0_2] : memref<128x128xbf16, #tpu.memory_space<vmem>>, vector<128x128xbf16>
    %cst = arith.constant dense<0.000000e+00> : vector<64x128xf32>
    %3 = tpu.matmul %1, %2, %cst {dimension_numbers = #tpu.dot_dimension_numbers<[1], [0], [0], [1], [0, 0, 1, 1], [], []>} : vector<64x128xbf16>, vector<128x128xbf16>, vector<64x128xf32> -> vector<64x128xf32>
    %c0_3 = arith.constant 0 : index
    %c0_4 = arith.constant 0 : index
    %4 = vector.load %arg2[%c0_3, %c0_4] : memref<1x128xf32, #tpu.memory_space<vmem>>, vector<1x128xf32>
    %5 = vector.broadcast %4 : vector<1x128xf32> to vector<64x128xf32>
    %6 = arith.addf %3, %5 : vector<64x128xf32>
    %cst_5 = arith.constant 0.000000e+00 : f32
    %7 = vector.broadcast %cst_5 : f32 to vector<64x128xf32>
    %8 = arith.maximumf %6, %7 : vector<64x128xf32>
    %9 = tpu.iota {dimensions = array<i32: 0>} : vector<64x128xi32>
    %c50_i32 = arith.constant 50 : i32
    %10 = vector.broadcast %c50_i32 : i32 to vector<64x128xi32>
    %11 = arith.cmpi slt, %9, %10 : vector<64x128xi32>
    %cst_6 = arith.constant 0.000000e+00 : f32
    %12 = vector.broadcast %cst_6 : f32 to vector<64x128xf32>
    %13 = arith.select %11, %8, %12 : vector<64x128xi1>, vector<64x128xf32>
    %cst_7 = arith.constant dense<0.000000e+00> : vector<128xf32>
    %14 = vector.multi_reduction <add>, %13, %cst_7 [0] : vector<64x128xf32> to vector<128xf32>
    %15 = vector.shape_cast %14 : vector<128xf32> to vector<1x128xf32>
    %cst_8 = arith.constant 2.000000e-02 : f32
    %16 = vector.broadcast %cst_8 : f32 to vector<1x128xf32>
    %17 = arith.mulf %15, %16 : vector<1x128xf32>
    %18 = arith.mulf %13, %13 : vector<64x128xf32>
    %cst_9 = arith.constant dense<0.000000e+00> : vector<128xf32>
    %19 = vector.multi_reduction <add>, %18, %cst_9 [0] : vector<64x128xf32> to vector<128xf32>
    %20 = vector.shape_cast %19 : vector<128xf32> to vector<1x128xf32>
    %cst_10 = arith.constant 2.000000e-02 : f32
    %21 = vector.broadcast %cst_10 : f32 to vector<1x128xf32>
    %22 = arith.mulf %20, %21 : vector<1x128xf32>
    %23 = arith.mulf %17, %17 : vector<1x128xf32>
    %24 = arith.subf %22, %23 : vector<1x128xf32>
    %cst_11 = arith.constant 0.000000e+00 : f32
    %25 = vector.broadcast %cst_11 : f32 to vector<1x128xf32>
    %26 = arith.maximumf %24, %25 : vector<1x128xf32>
    %c0_12 = arith.constant 0 : index
    %c0_13 = arith.constant 0 : index
    %27 = vector.load %arg3[%c0_12, %c0_13] : memref<2x128xf32, #tpu.memory_space<vmem>>, vector<1x128xf32>
    %cst_14 = arith.constant 9.99999974E-6 : f32
    %28 = vector.broadcast %cst_14 : f32 to vector<1x128xf32>
    %29 = arith.addf %26, %28 : vector<1x128xf32>
    %30 = math.rsqrt %29 : vector<1x128xf32>
    %31 = arith.mulf %27, %30 : vector<1x128xf32>
    %c1 = arith.constant 1 : index
    %c0_15 = arith.constant 0 : index
    %32 = vector.load %arg3[%c1, %c0_15] : memref<2x128xf32, #tpu.memory_space<vmem>>, vector<1x128xf32>
    %33 = arith.mulf %17, %31 : vector<1x128xf32>
    %34 = arith.subf %32, %33 : vector<1x128xf32>
    %35 = vector.broadcast %31 : vector<1x128xf32> to vector<64x128xf32>
    %36 = arith.mulf %8, %35 : vector<64x128xf32>
    %37 = vector.broadcast %34 : vector<1x128xf32> to vector<64x128xf32>
    %38 = arith.addf %36, %37 : vector<64x128xf32>
    %39 = arith.truncf %38 : vector<64x128xf32> to vector<64x128xbf16>
    %c0_16 = arith.constant 0 : index
    %c0_17 = arith.constant 0 : index
    %40 = vector.load %arg4[%c0_16, %c0_17] : memref<128x128xbf16, #tpu.memory_space<vmem>>, vector<128x128xbf16>
    %cst_18 = arith.constant dense<0.000000e+00> : vector<64x128xf32>
    %41 = tpu.matmul %39, %40, %cst_18 {dimension_numbers = #tpu.dot_dimension_numbers<[1], [0], [0], [1], [0, 0, 1, 1], [], []>} : vector<64x128xbf16>, vector<128x128xbf16>, vector<64x128xf32> -> vector<64x128xf32>
    %c0_19 = arith.constant 0 : index
    %c0_20 = arith.constant 0 : index
    %42 = vector.load %arg5[%c0_19, %c0_20] : memref<1x128xf32, #tpu.memory_space<vmem>>, vector<1x128xf32>
    %43 = vector.broadcast %42 : vector<1x128xf32> to vector<64x128xf32>
    %44 = arith.addf %41, %43 : vector<64x128xf32>
    %cst_21 = arith.constant 0.000000e+00 : f32
    %45 = vector.broadcast %cst_21 : f32 to vector<64x128xf32>
    %46 = arith.maximumf %44, %45 : vector<64x128xf32>
    %47 = tpu.iota {dimensions = array<i32: 0>} : vector<64x128xi32>
    %c50_i32_22 = arith.constant 50 : i32
    %48 = vector.broadcast %c50_i32_22 : i32 to vector<64x128xi32>
    %49 = arith.cmpi slt, %47, %48 : vector<64x128xi32>
    %cst_23 = arith.constant 0.000000e+00 : f32
    %50 = vector.broadcast %cst_23 : f32 to vector<64x128xf32>
    %51 = arith.select %49, %46, %50 : vector<64x128xi1>, vector<64x128xf32>
    %cst_24 = arith.constant dense<0.000000e+00> : vector<128xf32>
    %52 = vector.multi_reduction <add>, %51, %cst_24 [0] : vector<64x128xf32> to vector<128xf32>
    %53 = vector.shape_cast %52 : vector<128xf32> to vector<1x128xf32>
    %cst_25 = arith.constant 2.000000e-02 : f32
    %54 = vector.broadcast %cst_25 : f32 to vector<1x128xf32>
    %55 = arith.mulf %53, %54 : vector<1x128xf32>
    %56 = arith.mulf %51, %51 : vector<64x128xf32>
    %cst_26 = arith.constant dense<0.000000e+00> : vector<128xf32>
    %57 = vector.multi_reduction <add>, %56, %cst_26 [0] : vector<64x128xf32> to vector<128xf32>
    %58 = vector.shape_cast %57 : vector<128xf32> to vector<1x128xf32>
    %cst_27 = arith.constant 2.000000e-02 : f32
    %59 = vector.broadcast %cst_27 : f32 to vector<1x128xf32>
    %60 = arith.mulf %58, %59 : vector<1x128xf32>
    %61 = arith.mulf %55, %55 : vector<1x128xf32>
    %62 = arith.subf %60, %61 : vector<1x128xf32>
    %cst_28 = arith.constant 0.000000e+00 : f32
    %63 = vector.broadcast %cst_28 : f32 to vector<1x128xf32>
    %64 = arith.maximumf %62, %63 : vector<1x128xf32>
    %c0_29 = arith.constant 0 : index
    %c0_30 = arith.constant 0 : index
    %65 = vector.load %arg6[%c0_29, %c0_30] : memref<2x128xf32, #tpu.memory_space<vmem>>, vector<1x128xf32>
    %cst_31 = arith.constant 9.99999974E-6 : f32
    %66 = vector.broadcast %cst_31 : f32 to vector<1x128xf32>
    %67 = arith.addf %64, %66 : vector<1x128xf32>
    %68 = math.rsqrt %67 : vector<1x128xf32>
    %69 = arith.mulf %65, %68 : vector<1x128xf32>
    %c1_32 = arith.constant 1 : index
    %c0_33 = arith.constant 0 : index
    %70 = vector.load %arg6[%c1_32, %c0_33] : memref<2x128xf32, #tpu.memory_space<vmem>>, vector<1x128xf32>
    %71 = arith.mulf %55, %69 : vector<1x128xf32>
    %72 = arith.subf %70, %71 : vector<1x128xf32>
    %73 = vector.broadcast %69 : vector<1x128xf32> to vector<64x128xf32>
    %74 = arith.mulf %46, %73 : vector<64x128xf32>
    %75 = vector.broadcast %72 : vector<1x128xf32> to vector<64x128xf32>
    %76 = arith.addf %74, %75 : vector<64x128xf32>
    %77 = arith.truncf %76 : vector<64x128xf32> to vector<64x128xbf16>
    %c0_34 = arith.constant 0 : index
    %c0_35 = arith.constant 0 : index
    %78 = vector.load %arg7[%c0_34, %c0_35] : memref<128x128xbf16, #tpu.memory_space<vmem>>, vector<128x128xbf16>
    %cst_36 = arith.constant dense<0.000000e+00> : vector<64x128xf32>
    %79 = tpu.matmul %77, %78, %cst_36 {dimension_numbers = #tpu.dot_dimension_numbers<[1], [0], [0], [1], [0, 0, 1, 1], [], []>} : vector<64x128xbf16>, vector<128x128xbf16>, vector<64x128xf32> -> vector<64x128xf32>
    %c0_37 = arith.constant 0 : index
    %c0_38 = arith.constant 0 : index
    %80 = vector.load %arg8[%c0_37, %c0_38] : memref<1x128xf32, #tpu.memory_space<vmem>>, vector<1x128xf32>
    %81 = vector.broadcast %80 : vector<1x128xf32> to vector<64x128xf32>
    %82 = arith.addf %79, %81 : vector<64x128xf32>
    %c0_39 = arith.constant 0 : index
    %c0_40 = arith.constant 0 : index
    %83 = vector.load %arg9[%c0_39, %c0_40] : memref<64x128xf32, #tpu.memory_space<vmem>>, vector<64x128xf32>
    tpu.vector_store %arg9[%c0_39, %c0_40], %82 {strides = array<i32>} : memref<64x128xf32, #tpu.memory_space<vmem>>, vector<64x128xf32>,
    return
  }
}

</mosaic_0001>

<llo_original>
// kernel: tpu_custom_call.1
$region0: #{tpu_custom_call.1}
  #allocation0 [shape = 'u32[]', space=smem, size = 0x4, offset = 0x4, fixed_abs, tag = 'smem constant byte address 0x4 - core index']
  #allocation1 [shape = 'u32[144,128]{1,0:T(1,128)}', space=vmem, size = 0x12000, scoped, tag = 'internal scratch']
  %s0 = inlined_call_operand.hbm [shape: f32[64,128], index: 0, kind: input, shape index: {}]
  %s1 = inlined_call_operand.hbm [shape: bf16[128,128], index: 1, kind: input, shape index: {}]
  %s2 = inlined_call_operand.vmem [shape: f32[1,128], index: 2, kind: input, shape index: {}]
  %s3 = inlined_call_operand.vmem [shape: f32[2,128], index: 3, kind: input, shape index: {}]
  %s4 = inlined_call_operand.hbm [shape: bf16[128,128], index: 4, kind: input, shape index: {}]
  %s5 = inlined_call_operand.vmem [shape: f32[1,128], index: 5, kind: input, shape index: {}]
  %s6 = inlined_call_operand.vmem [shape: f32[2,128], index: 6, kind: input, shape index: {}]
  %s7 = inlined_call_operand.hbm [shape: bf16[128,128], index: 7, kind: input, shape index: {}]
  %s8 = inlined_call_operand.vmem [shape: f32[1,128], index: 8, kind: input, shape index: {}]
  %s9 = inlined_call_operand.hbm [shape: f32[64,128], index: 9, kind: output, shape index: {}]
  %s10 = sld [smem:[#allocation0]]
  $region62: #{tpu_custom_call.1} parent=0
    _
  %s12 = ssub.s32 1, %s10
  %s13 = scalar_select 0, %s12, %s10
  $region1: #{tpu_custom_call.1} parent=0
    #allocation2 [shape = 'u8[32768]{0}', space=vmem, size = 0x8000, scoped, tag = 'input window, operand 0, single buffered']
    #allocation3 [shape = 's32[1]{0}', space=sflag, size = 0x4, scoped, tag = 'scoped memory for tpu_custom_call.1']
    #allocation4 [shape = 's32[1]{0}', space=sflag, size = 0x4, scoped, tag = 'scoped memory for tpu_custom_call.1']
    #allocation5 [shape = 'u8[32768]{0}', space=vmem, size = 0x8000, scoped, tag = 'input window, operand 1, single buffered']
    #allocation6 [shape = 's32[1]{0}', space=sflag, size = 0x4, scoped, tag = 'scoped memory for tpu_custom_call.1']
    #allocation7 [shape = 'u8[32768]{0}', space=vmem, size = 0x8000, scoped, tag = 'input window, operand 4, single buffered']
    #allocation8 [shape = 'u8[32768]{0}', space=vmem, size = 0x8000, scoped, tag = 'input window, operand 7, single buffered']
    #allocation9 [shape = 's32[1]{0}', space=sflag, size = 0x4, scoped, tag = 'scoped memory for tpu_custom_call.1']
    #allocation10 [shape = 'u8[32768]{0}', space=vmem, size = 0x8000, scoped, tag = 'output window, operand 0, single buffered']
    %14 = vsyncpa [#allocation3], 0
    %15 = vsyncpa [#allocation6], 0
    %16 = vsyncpa [#allocation9], 0
    %17 = vsyncpa [#allocation4], 0
    // Predicated region
    $region2: #{tpu_custom_call.1} parent=1 // pred_check
      _
    $region3: #{tpu_custom_call.1} parent=1 // pred_check_branch
      %19 = sbr.rel (0) target = $region5
    $region4: #{tpu_custom_call.1} parent=1 // pred_region
      %s21 = ssub.s32 1024, 1024
      %22 = vsyncadd [#allocation3], %s21
      %s23 = sshll.u32 [#allocation2], 4
      %s24 = int_to_ptr.vmem [resolvable:$true] %s23
      %29 = dma.hbm_to_vmem [thread:$0]  %s0, 1024, %s24, [#allocation3], 128, 128, 8
    $region5: #{tpu_custom_call.1} parent=1 // pred_fallthru
      _
    // Predicated region
    $region6: #{tpu_custom_call.1} parent=1 // pred_check
      _
    $region7: #{tpu_custom_call.1} parent=1 // pred_check_branch
      %31 = sbr.rel (0) target = $region9
    $region8: #{tpu_custom_call.1} parent=1 // pred_region
      %s33 = ssub.s32 1024, 1024
      %34 = vsyncadd [#allocation6], %s33
      %s35 = sshll.u32 [#allocation5], 4
      %s36 = int_to_ptr.vmem [resolvable:$true] %s35
      %41 = dma.hbm_to_vmem [thread:$0]  %s1, 1024, %s36, [#allocation6], 64, 64, 4
    $region9: #{tpu_custom_call.1} parent=1 // pred_fallthru
      _
    // Predicated region
    $region10: #{tpu_custom_call.1} parent=1 // pred_check
      _
    $region11: #{tpu_custom_call.1} parent=1 // pred_check_branch
      %43 = sbr.rel (0) target = $region13
    $region12: #{tpu_custom_call.1} parent=1 // pred_region
      _
    $region13: #{tpu_custom_call.1} parent=1 // pred_fallthru
      _
    // Predicated region
    $region14: #{tpu_custom_call.1} parent=1 // pred_check
      _
    $region15: #{tpu_custom_call.1} parent=1 // pred_check_branch
      %45 = sbr.rel (0) target = $region17
    $region16: #{tpu_custom_call.1} parent=1 // pred_region
      _
    $region17: #{tpu_custom_call.1} parent=1 // pred_fallthru
      _
    // Predicated region
    $region18: #{tpu_custom_call.1} parent=1 // pred_check
      _
    $region19: #{tpu_custom_call.1} parent=1 // pred_check_branch
      %47 = sbr.rel (0) target = $region21
    $region20: #{tpu_custom_call.1} parent=1 // pred_region
      %s49 = ssub.s32 1024, 1024
      %50 = vsyncadd [#allocation6], %s49
      %s51 = sshll.u32 [#allocation7], 4
      %s52 = int_to_ptr.vmem [resolvable:$true] %s51
      %57 = dma.hbm_to_vmem [thread:$0]  %s4, 1024, %s52, [#allocation6], 64, 64, 4
    $region21: #{tpu_custom_call.1} parent=1 // pred_fallthru
      _
    // Predicated region
    $region22: #{tpu_custom_call.1} parent=1 // pred_check
      _
    $region23: #{tpu_custom_call.1} parent=1 // pred_check_branch
      %59 = sbr.rel (0) target = $region25
    $region24: #{tpu_custom_call.1} parent=1 // pred_region
      _
    $region25: #{tpu_custom_call.1} parent=1 // pred_fallthru
      _
    // Predicated region
    $region26: #{tpu_custom_call.1} parent=1 // pred_check
      _
    $region27: #{tpu_custom_call.1} parent=1 // pred_check_branch
      %61 = sbr.rel (0) target = $region29
    $region28: #{tpu_custom_call.1} parent=1 // pred_region
      _
    $region29: #{tpu_custom_call.1} parent=1 // pred_fallthru
      _
    // Predicated region
    $region30: #{tpu_custom_call.1} parent=1 // pred_check
      _
    $region31: #{tpu_custom_call.1} parent=1 // pred_check_branch
      %63 = sbr.rel (0) target = $region33
    $region32: #{tpu_custom_call.1} parent=1 // pred_region
      %s65 = ssub.s32 1024, 1024
      %66 = vsyncadd [#allocation9], %s65
      %s67 = sshll.u32 [#allocation8], 4
      %s68 = int_to_ptr.vmem [resolvable:$true] %s67
      %73 = dma.hbm_to_vmem [thread:$0]  %s7, 1024, %s68, [#allocation9], 64, 64, 4
    $region33: #{tpu_custom_call.1} parent=1 // pred_fallthru
      _
    // Predicated region
    $region34: #{tpu_custom_call.1} parent=1 // pred_check
      _
    $region35: #{tpu_custom_call.1} parent=1 // pred_check_branch
      %75 = sbr.rel (0) target = $region37
    $region36: #{tpu_custom_call.1} parent=1 // pred_region
      _
    $region37: #{tpu_custom_call.1} parent=1 // pred_fallthru
      _
    // Predicated region
    $region38: #{tpu_custom_call.1} parent=1 // pred_check
      _
    $region39: #{tpu_custom_call.1} parent=1 // pred_check_branch
      %77 = sbr.rel (0) target = $region41
    $region40: #{tpu_custom_call.1} parent=1 // pred_region
      %78 = dma.done [#allocation3], 1024
    $region41: #{tpu_custom_call.1} parent=1 // pred_fallthru
      _
    // Predicated region
    $region42: #{tpu_custom_call.1} parent=1 // pred_check
      _
    $region43: #{tpu_custom_call.1} parent=1 // pred_check_branch
      %80 = sbr.rel (0) target = $region45
    $region44: #{tpu_custom_call.1} parent=1 // pred_region
      %81 = dma.done [#allocation6], 1024
    $region45: #{tpu_custom_call.1} parent=1 // pred_fallthru
      _
    // Predicated region
    $region46: #{tpu_custom_call.1} parent=1 // pred_check
      _
    $region47: #{tpu_custom_call.1} parent=1 // pred_check_branch
      %83 = sbr.rel (0) target = $region49
    $region48: #{tpu_custom_call.1} parent=1 // pred_region
      %84 = dma.done [#allocation6], 1024
    $region49: #{tpu_custom_call.1} parent=1 // pred_fallthru
      _
    // Predicated region
    $region50: #{tpu_custom_call.1} parent=1 // pred_check
      _
    $region51: #{tpu_custom_call.1} parent=1 // pred_check_branch
      %86 = sbr.rel (0) target = $region53
    $region52: #{tpu_custom_call.1} parent=1 // pred_region
      %87 = dma.done [#allocation9], 1024
    $region53: #{tpu_custom_call.1} parent=1 // pred_fallthru
      _
    %v89 = vld [vmem:[#allocation2] sm:$0xff]
    %v90 = vld [vmem:[#allocation2 + $0x8] sm:$0xff]
    %v91 = vld [vmem:[#allocation2 + $0x10] sm:$0xff]
    %v92 = vld [vmem:[#allocation2 + $0x18] sm:$0xff]
    %v93 = vld [vmem:[#allocation2 + $0x20] sm:$0xff]
    %v94 = vld [vmem:[#allocation2 + $0x28] sm:$0xff]
    %v95 = vld [vmem:[#allocation2 + $0x30] sm:$0xff]
    %v96 = vld [vmem:[#allocation2 + $0x38] sm:$0xff]
    %v97 = vpack.c.bf16 %v90, %v89
    %v98 = vpack.c.bf16 %v92, %v91
    %v99 = vpack.c.bf16 %v94, %v93
    %v100 = vpack.c.bf16 %v96, %v95
    %v101 = vld [vmem:[#allocation5] sm:$0xf]
    %v102 = vld [vmem:[#allocation5 + $0x4] sm:$0xf]
    %v103 = vld [vmem:[#allocation5 + $0x8] sm:$0xf]
    %v104 = vld [vmem:[#allocation5 + $0xc] sm:$0xf]
    %v105 = vld [vmem:[#allocation5 + $0x10] sm:$0xf]
    %v106 = vld [vmem:[#allocation5 + $0x14] sm:$0xf]
    %v107 = vld [vmem:[#allocation5 + $0x18] sm:$0xf]
    %v108 = vld [vmem:[#allocation5 + $0x1c] sm:$0xf]
    %v109 = vld [vmem:[#allocation5 + $0x20] sm:$0xf]
    %v110 = vld [vmem:[#allocation5 + $0x24] sm:$0xf]
    %v111 = vld [vmem:[#allocation5 + $0x28] sm:$0xf]
    %v112 = vld [vmem:[#allocation5 + $0x2c] sm:$0xf]
    %v113 = vld [vmem:[#allocation5 + $0x30] sm:$0xf]
    %v114 = vld [vmem:[#allocation5 + $0x34] sm:$0xf]
    %v115 = vld [vmem:[#allocation5 + $0x38] sm:$0xf]
    %v116 = vld [vmem:[#allocation5 + $0x3c] sm:$0xf]
    %v117 = vld [vmem:[%s2] sm:$0x1]
    %v119 = vlaneseq
    %v120 = vshrl.u32 %v119, 7
    %v121 = vsub.s32 0, %v120
    %v122 = vrot.slane %v117, %v121
    %v140 = vunpack.c.l.b16 %v101
    %v141 = vunpack.c.l.b16 %v102
    %v142 = vunpack.c.l.b16 %v103
    %v143 = vunpack.c.l.b16 %v104
    %v144 = vunpack.c.l.b16 %v105
    %v145 = vunpack.c.l.b16 %v106
    %v146 = vunpack.c.l.b16 %v107
    %v147 = vunpack.c.l.b16 %v108
    %v148 = vunpack.c.l.b16 %v109
    %v149 = vunpack.c.l.b16 %v110
    %v150 = vunpack.c.l.b16 %v111
    %v151 = vunpack.c.l.b16 %v112
    %v152 = vunpack.c.l.b16 %v113
    %v153 = vunpack.c.l.b16 %v114
    %v154 = vunpack.c.l.b16 %v115
    %v155 = vunpack.c.l.b16 %v116
    %v156 = vpack.c.b16 %v141, %v140
    %v157 = vpack.c.b16 %v143, %v142
    %v158 = vpack.c.b16 %v145, %v144
    %v159 = vpack.c.b16 %v147, %v146
    %v160 = vpack.c.b16 %v149, %v148
    %v161 = vpack.c.b16 %v151, %v150
    %v162 = vpack.c.b16 %v153, %v152
    %v163 = vpack.c.b16 %v155, %v154
    %172 = vmatprep.subr.bf16.mxu0 0
    %173 = vmatpush1.bf16.msra.mxu0 %v156
    %174 = vmatprep.subr.bf16.mxu0 0
    %175 = vmatpush1.bf16.msra.mxu0 %v157
    %176 = vmatprep.subr.bf16.mxu0 0
    %177 = vmatpush1.bf16.msra.mxu0 %v158
    %178 = vmatprep.subr.bf16.mxu0 0
    %179 = vmatpush1.bf16.msra.mxu0 %v159
    %180 = vmatprep.subr.bf16.mxu0 0
    %181 = vmatpush1.bf16.msra.mxu0 %v160
    %182 = vmatprep.subr.bf16.mxu0 0
    %183 = vmatpush1.bf16.msra.mxu0 %v161
    %184 = vmatprep.subr.bf16.mxu0 0
    %185 = vmatpush1.bf16.msra.mxu0 %v162
    %186 = vmatprep.subr.bf16.mxu0 0
    %187 = vmatpush1.bf16.msra.mxu0 %v163
    %188 = vmatprep.subr.bf16.mxu0 0
    %189 = vmatpush1.bf16.msra.mxu0 0
    %190 = vmatprep.subr.bf16.mxu0 0
    %191 = vmatpush1.bf16.msra.mxu0 0
    %192 = vmatprep.subr.bf16.mxu0 0
    %193 = vmatpush1.bf16.msra.mxu0 0
    %194 = vmatprep.subr.bf16.mxu0 0
    %195 = vmatpush1.bf16.msra.mxu0 0
    %196 = vmatprep.subr.bf16.mxu0 0
    %197 = vmatpush1.bf16.msra.mxu0 0
    %198 = vmatprep.subr.bf16.mxu0 0
    %199 = vmatpush1.bf16.msra.mxu0 0
    %200 = vmatprep.subr.bf16.mxu0 0
    %201 = vmatpush1.bf16.msra.mxu0 0
    %202 = vmatprep.subr.bf16.mxu0 0
    %203 = vmatpush1.bf16.msra.mxu0 0
    %204 = vmatprep.mubr.bf16.mxu0 0
    %205 = vmatmul.mubr.bf16.gmra.mrb[0].mxu0 %v97
    %v206 = vpop.f32.mrb[0].mxu0
    %v207 = vadd.f32 %v122, %v206
    %v208 = vpop.f32.mrb[0].mxu0
    %v209 = vpop.f32.mrb[0].mxu0
    %v210 = vadd.f32 %v122, %v209
    %v211 = vpop.f32.mrb[0].mxu0
    %212 = vmatprep.mubr.bf16.mxu0 0
    %213 = vmatmul.mubr.bf16.gmra.mrb[0].mxu0 %v98
    %v214 = vpop.f32.mrb[0].mxu0
    %v215 = vadd.f32 %v122, %v214
    %v216 = vpop.f32.mrb[0].mxu0
    %v217 = vpop.f32.mrb[0].mxu0
    %v218 = vadd.f32 %v122, %v217
    %v219 = vpop.f32.mrb[0].mxu0
    %220 = vmatprep.mubr.bf16.mxu0 0
    %221 = vmatmul.mubr.bf16.gmra.mrb[0].mxu0 %v99
    %v222 = vpop.f32.mrb[0].mxu0
    %v223 = vadd.f32 %v122, %v222
    %v224 = vpop.f32.mrb[0].mxu0
    %v225 = vpop.f32.mrb[0].mxu0
    %v226 = vadd.f32 %v122, %v225
    %v227 = vpop.f32.mrb[0].mxu0
    %228 = vmatprep.mubr.bf16.mxu0 0
    %229 = vmatmul.mubr.bf16.gmra.mrb[0].mxu0 %v100
    %v230 = vpop.f32.mrb[0].mxu0
    %v231 = vadd.f32 %v122, %v230
    %v232 = vpop.f32.mrb[0].mxu0
    %v233 = vpop.f32.mrb[0].mxu0
    %v234 = vadd.f32 %v122, %v233
    %v235 = vpop.f32.mrb[0].mxu0
    %236 = vdwg.mxu0
    %v237 = vmax.f32 %v207, 0.0
    %v238 = vmax.f32 %v210, 0.0
    %v239 = vmax.f32 %v215, 0.0
    %v240 = vmax.f32 %v218, 0.0
    %v241 = vmax.f32 %v223, 0.0
    %v242 = vmax.f32 %v226, 0.0
    %v243 = vmax.f32 %v231, 0.0
    %v244 = vmax.f32 %v234, 0.0
    %v245 = vlaneseq
    %v246 = vshrl.u32 %v245, 7
    %v247 = vadd.s32 %v246, 8
    %v248 = vadd.s32 %v246, 16
    %v249 = vadd.s32 %v246, 24
    %v250 = vadd.s32 %v246, 32
    %v251 = vadd.s32 %v246, 40
    %v252 = vadd.s32 %v246, 48
    %v253 = vadd.s32 %v246, 56
    %vm254 = vcmp.lt.s32.totalorder %v246, 50
    %vm255 = vcmp.lt.s32.totalorder %v247, 50
    %vm256 = vcmp.lt.s32.totalorder %v248, 50
    %vm257 = vcmp.lt.s32.totalorder %v249, 50
    %vm258 = vcmp.lt.s32.totalorder %v250, 50
    %vm259 = vcmp.lt.s32.totalorder %v251, 50
    %vm260 = vcmp.lt.s32.totalorder %v252, 50
    %vm261 = vcmp.lt.s32.totalorder %v253, 50
    %v262 = vsel %vm254, %v237, 0.0
    %v263 = vsel %vm255, %v238, 0.0
    %v264 = vsel %vm256, %v239, 0.0
    %v265 = vsel %vm257, %v240, 0.0
    %v266 = vsel %vm258, %v241, 0.0
    %v267 = vsel %vm259, %v242, 0.0
    %v268 = vsel %vm260, %v243, 0.0
    %v269 = vsel %vm261, %v244, 0.0
    %v270 = vadd.f32 %v262, %v263
    %v271 = vadd.f32 %v270, %v264
    %v272 = vadd.f32 %v271, %v265
    %v273 = vadd.f32 %v272, %v266
    %v274 = vadd.f32 %v273, %v267
    %v275 = vadd.f32 %v274, %v268
    %v276 = vadd.f32 %v275, %v269
    %v277 = vrot.slane %v276, 4
    %v278 = vadd.f32 %v276, %v277
    %v279 = vrot.slane %v278, 2
    %v280 = vadd.f32 %v278, %v279
    %v281 = vrot.slane %v280, 1
    %v282 = vadd.f32 %v280, %v281
    %v283 = vmul.f32 %v282, 0.02
    %v284 = vmul.f32 %v262, %v262
    %v285 = vmul.f32 %v263, %v263
    %v286 = vmul.f32 %v264, %v264
    %v287 = vmul.f32 %v265, %v265
    %v288 = vmul.f32 %v266, %v266
    %v289 = vmul.f32 %v267, %v267
    %v290 = vmul.f32 %v268, %v268
    %v291 = vmul.f32 %v269, %v269
    %v292 = vadd.f32 %v284, %v285
    %v293 = vadd.f32 %v292, %v286
    %v294 = vadd.f32 %v293, %v287
    %v295 = vadd.f32 %v294, %v288
    %v296 = vadd.f32 %v295, %v289
    %v297 = vadd.f32 %v296, %v290
    %v298 = vadd.f32 %v297, %v291
    %v299 = vrot.slane %v298, 4
    %v300 = vadd.f32 %v298, %v299
    %v301 = vrot.slane %v300, 2
    %v302 = vadd.f32 %v300, %v301
    %v303 = vrot.slane %v302, 1
    %v304 = vadd.f32 %v302, %v303
    %v305 = vmul.f32 %v304, 0.02
    %v306 = vmul.f32 %v283, %v283
    %v307 = vsub.f32 %v305, %v306
    %v308 = vmax.f32 %v307, 0.0
    %v309 = vld [vmem:[%s3] sm:$0x1]
    %v310 = vadd.f32 %v308, 1e-05
    %v311 = vrsqrt.pop %v310
    %v312 = vmul.f32 %v309, %v311
    %v313 = vld [vmem:[%s3 + $0x1] sm:$0x1]
    %v314 = vmul.f32 %v283, %v312
    %v315 = vsub.f32 %v313, %v314
    %v316 = vlaneseq
    %v317 = vshrl.u32 %v316, 7
    %v318 = vsub.s32 0, %v317
    %v319 = vrot.slane %v312, %v318
    %v320 = vmul.f32 %v237, %v319
    %v321 = vmul.f32 %v238, %v319
    %v322 = vmul.f32 %v239, %v319
    %v323 = vmul.f32 %v240, %v319
    %v324 = vmul.f32 %v241, %v319
    %v325 = vmul.f32 %v242, %v319
    %v326 = vmul.f32 %v243, %v319
    %v327 = vmul.f32 %v244, %v319
    %v328 = vlaneseq
    %v329 = vshrl.u32 %v328, 7
    %v330 = vsub.s32 0, %v329
    %v331 = vrot.slane %v315, %v330
    %v332 = vadd.f32 %v320, %v331
    %v333 = vadd.f32 %v321, %v331
    %v334 = vadd.f32 %v322, %v331
    %v335 = vadd.f32 %v323, %v331
    %v336 = vadd.f32 %v324, %v331
    %v337 = vadd.f32 %v325, %v331
    %v338 = vadd.f32 %v326, %v331
    %v339 = vadd.f32 %v327, %v331
    %v340 = vpack.c.bf16 %v333, %v332
    %v341 = vpack.c.bf16 %v335, %v334
    %v342 = vpack.c.bf16 %v337, %v336
    %v343 = vpack.c.bf16 %v339, %v338
    %v344 = vld [vmem:[#allocation7] sm:$0xf]
    %v345 = vld [vmem:[#allocation7 + $0x4] sm:$0xf]
    %v346 = vld [vmem:[#allocation7 + $0x8] sm:$0xf]
    %v347 = vld [vmem:[#allocation7 + $0xc] sm:$0xf]
    %v348 = vld [vmem:[#allocation7 + $0x10] sm:$0xf]
    %v349 = vld [vmem:[#allocation7 + $0x14] sm:$0xf]
    %v350 = vld [vmem:[#allocation7 + $0x18] sm:$0xf]
    %v351 = vld [vmem:[#allocation7 + $0x1c] sm:$0xf]
    %v352 = vld [vmem:[#allocation7 + $0x20] sm:$0xf]
    %v353 = vld [vmem:[#allocation7 + $0x24] sm:$0xf]
    %v354 = vld [vmem:[#allocation7 + $0x28] sm:$0xf]
    %v355 = vld [vmem:[#allocation7 + $0x2c] sm:$0xf]
    %v356 = vld [vmem:[#allocation7 + $0x30] sm:$0xf]
    %v357 = vld [vmem:[#allocation7 + $0x34] sm:$0xf]
    %v358 = vld [vmem:[#allocation7 + $0x38] sm:$0xf]
    %v359 = vld [vmem:[#allocation7 + $0x3c] sm:$0xf]
    %v360 = vld [vmem:[%s5] sm:$0x1]
    %v362 = vlaneseq
    %v363 = vshrl.u32 %v362, 7
    %v364 = vsub.s32 0, %v363
    %v365 = vrot.slane %v360, %v364
    %v383 = vunpack.c.l.b16 %v344
    %v384 = vunpack.c.l.b16 %v345
    %v385 = vunpack.c.l.b16 %v346
    %v386 = vunpack.c.l.b16 %v347
    %v387 = vunpack.c.l.b16 %v348
    %v388 = vunpack.c.l.b16 %v349
    %v389 = vunpack.c.l.b16 %v350
    %v390 = vunpack.c.l.b16 %v351
    %v391 = vunpack.c.l.b16 %v352
    %v392 = vunpack.c.l.b16 %v353
    %v393 = vunpack.c.l.b16 %v354
    %v394 = vunpack.c.l.b16 %v355
    %v395 = vunpack.c.l.b16 %v356
    %v396 = vunpack.c.l.b16 %v357
    %v397 = vunpack.c.l.b16 %v358
    %v398 = vunpack.c.l.b16 %v359
    %v399 = vpack.c.b16 %v384, %v383
    %v400 = vpack.c.b16 %v386, %v385
    %v401 = vpack.c.b16 %v388, %v387
    %v402 = vpack.c.b16 %v390, %v389
    %v403 = vpack.c.b16 %v392, %v391
    %v404 = vpack.c.b16 %v394, %v393
    %v405 = vpack.c.b16 %v396, %v395
    %v406 = vpack.c.b16 %v398, %v397
    %415 = vmatprep.subr.bf16.mxu0 0
    %416 = vmatpush1.bf16.msra.mxu0 %v399
    %417 = vmatprep.subr.bf16.mxu0 0
    %418 = vmatpush1.bf16.msra.mxu0 %v400
    %419 = vmatprep.subr.bf16.mxu0 0
    %420 = vmatpush1.bf16.msra.mxu0 %v401
    %421 = vmatprep.subr.bf16.mxu0 0
    %422 = vmatpush1.bf16.msra.mxu0 %v402
    %423 = vmatprep.subr.bf16.mxu0 0
    %424 = vmatpush1.bf16.msra.mxu0 %v403
    %425 = vmatprep.subr.bf16.mxu0 0
    %426 = vmatpush1.bf16.msra.mxu0 %v404
    %427 = vmatprep.subr.bf16.mxu0 0
    %428 = vmatpush1.bf16.msra.mxu0 %v405
    %429 = vmatprep.subr.bf16.mxu0 0
    %430 = vmatpush1.bf16.msra.mxu0 %v406
    %431 = vmatprep.subr.bf16.mxu0 0
    %432 = vmatpush1.bf16.msra.mxu0 0
    %433 = vmatprep.subr.bf16.mxu0 0
    %434 = vmatpush1.bf16.msra.mxu0 0
    %435 = vmatprep.subr.bf16.mxu0 0
    %436 = vmatpush1.bf16.msra.mxu0 0
    %437 = vmatprep.subr.bf16.mxu0 0
    %438 = vmatpush1.bf16.msra.mxu0 0
    %439 = vmatprep.subr.bf16.mxu0 0
    %440 = vmatpush1.bf16.msra.mxu0 0
    %441 = vmatprep.subr.bf16.mxu0 0
    %442 = vmatpush1.bf16.msra.mxu0 0
    %443 = vmatprep.subr.bf16.mxu0 0
    %444 = vmatpush1.bf16.msra.mxu0 0
    %445 = vmatprep.subr.bf16.mxu0 0
    %446 = vmatpush1.bf16.msra.mxu0 0
    %447 = vmatprep.mubr.bf16.mxu0 0
    %448 = vmatmul.mubr.bf16.gmra.mrb[0].mxu0 %v340
    %v449 = vpop.f32.mrb[0].mxu0
    %v450 = vadd.f32 %v365, %v449
    %v451 = vpop.f32.mrb[0].mxu0
    %v452 = vpop.f32.mrb[0].mxu0
    %v453 = vadd.f32 %v365, %v452
    %v454 = vpop.f32.mrb[0].mxu0
    %455 = vmatprep.mubr.bf16.mxu0 0
    %456 = vmatmul.mubr.bf16.gmra.mrb[0].mxu0 %v341
    %v457 = vpop.f32.mrb[0].mxu0
    %v458 = vadd.f32 %v365, %v457
    %v459 = vpop.f32.mrb[0].mxu0
    %v460 = vpop.f32.mrb[0].mxu0
    %v461 = vadd.f32 %v365, %v460
    %v462 = vpop.f32.mrb[0].mxu0
    %463 = vmatprep.mubr.bf16.mxu0 0
    %464 = vmatmul.mubr.bf16.gmra.mrb[0].mxu0 %v342
    %v465 = vpop.f32.mrb[0].mxu0
    %v466 = vadd.f32 %v365, %v465
    %v467 = vpop.f32.mrb[0].mxu0
    %v468 = vpop.f32.mrb[0].mxu0
    %v469 = vadd.f32 %v365, %v468
    %v470 = vpop.f32.mrb[0].mxu0
    %471 = vmatprep.mubr.bf16.mxu0 0
    %472 = vmatmul.mubr.bf16.gmra.mrb[0].mxu0 %v343
    %v473 = vpop.f32.mrb[0].mxu0
    %v474 = vadd.f32 %v365, %v473
    %v475 = vpop.f32.mrb[0].mxu0
    %v476 = vpop.f32.mrb[0].mxu0
    %v477 = vadd.f32 %v365, %v476
    %v478 = vpop.f32.mrb[0].mxu0
    %479 = vdwg.mxu0
    %v480 = vmax.f32 %v450, 0.0
    %v481 = vmax.f32 %v453, 0.0
    %v482 = vmax.f32 %v458, 0.0
    %v483 = vmax.f32 %v461, 0.0
    %v484 = vmax.f32 %v466, 0.0
    %v485 = vmax.f32 %v469, 0.0
    %v486 = vmax.f32 %v474, 0.0
    %v487 = vmax.f32 %v477, 0.0
    %v488 = vsel %vm254, %v480, 0.0
    %v489 = vsel %vm255, %v481, 0.0
    %v490 = vsel %vm256, %v482, 0.0
    %v491 = vsel %vm257, %v483, 0.0
    %v492 = vsel %vm258, %v484, 0.0
    %v493 = vsel %vm259, %v485, 0.0
    %v494 = vsel %vm260, %v486, 0.0
    %v495 = vsel %vm261, %v487, 0.0
    %v496 = vadd.f32 %v488, %v489
    %v497 = vadd.f32 %v496, %v490
    %v498 = vadd.f32 %v497, %v491
    %v499 = vadd.f32 %v498, %v492
    %v500 = vadd.f32 %v499, %v493
    %v501 = vadd.f32 %v500, %v494
    %v502 = vadd.f32 %v501, %v495
    %v503 = vrot.slane %v502, 4
    %v504 = vadd.f32 %v502, %v503
    %v505 = vrot.slane %v504, 2
    %v506 = vadd.f32 %v504, %v505
    %v507 = vrot.slane %v506, 1
    %v508 = vadd.f32 %v506, %v507
    %v509 = vmul.f32 %v508, 0.02
    %v510 = vmul.f32 %v488, %v488
    %v511 = vmul.f32 %v489, %v489
    %v512 = vmul.f32 %v490, %v490
    %v513 = vmul.f32 %v491, %v491
    %v514 = vmul.f32 %v492, %v492
    %v515 = vmul.f32 %v493, %v493
    %v516 = vmul.f32 %v494, %v494
    %v517 = vmul.f32 %v495, %v495
    %v518 = vadd.f32 %v510, %v511
    %v519 = vadd.f32 %v518, %v512
    %v520 = vadd.f32 %v519, %v513
    %v521 = vadd.f32 %v520, %v514
    %v522 = vadd.f32 %v521, %v515
    %v523 = vadd.f32 %v522, %v516
    %v524 = vadd.f32 %v523, %v517
    %v525 = vrot.slane %v524, 4
    %v526 = vadd.f32 %v524, %v525
    %v527 = vrot.slane %v526, 2
    %v528 = vadd.f32 %v526, %v527
    %v529 = vrot.slane %v528, 1
    %v530 = vadd.f32 %v528, %v529
    %v531 = vmul.f32 %v530, 0.02
    %v532 = vmul.f32 %v509, %v509
    %v533 = vsub.f32 %v531, %v532
    %v534 = vmax.f32 %v533, 0.0
    %v535 = vld [vmem:[%s6] sm:$0x1]
    %v536 = vadd.f32 %v534, 1e-05
    %v537 = vrsqrt.pop %v536
    %v538 = vmul.f32 %v535, %v537
    %v539 = vld [vmem:[%s6 + $0x1] sm:$0x1]
    %v540 = vmul.f32 %v509, %v538
    %v541 = vsub.f32 %v539, %v540
    %v542 = vlaneseq
    %v543 = vshrl.u32 %v542, 7
    %v544 = vsub.s32 0, %v543
    %v545 = vrot.slane %v538, %v544
    %v546 = vmul.f32 %v480, %v545
    %v547 = vmul.f32 %v481, %v545
    %v548 = vmul.f32 %v482, %v545
    %v549 = vmul.f32 %v483, %v545
    %v550 = vmul.f32 %v484, %v545
    %v551 = vmul.f32 %v485, %v545
    %v552 = vmul.f32 %v486, %v545
    %v553 = vmul.f32 %v487, %v545
    %v554 = vlaneseq
    %v555 = vshrl.u32 %v554, 7
    %v556 = vsub.s32 0, %v555
    %v557 = vrot.slane %v541, %v556
    %v558 = vadd.f32 %v546, %v557
    %v559 = vadd.f32 %v547, %v557
    %v560 = vadd.f32 %v548, %v557
    %v561 = vadd.f32 %v549, %v557
    %v562 = vadd.f32 %v550, %v557
    %v563 = vadd.f32 %v551, %v557
    %v564 = vadd.f32 %v552, %v557
    %v565 = vadd.f32 %v553, %v557
    %v566 = vpack.c.bf16 %v559, %v558
    %v567 = vpack.c.bf16 %v561, %v560
    %v568 = vpack.c.bf16 %v563, %v562
    %v569 = vpack.c.bf16 %v565, %v564
    %v570 = vld [vmem:[#allocation8] sm:$0xf]
    %v571 = vld [vmem:[#allocation8 + $0x4] sm:$0xf]
    %v572 = vld [vmem:[#allocation8 + $0x8] sm:$0xf]
    %v573 = vld [vmem:[#allocation8 + $0xc] sm:$0xf]
    %v574 = vld [vmem:[#allocation8 + $0x10] sm:$0xf]
    %v575 = vld [vmem:[#allocation8 + $0x14] sm:$0xf]
    %v576 = vld [vmem:[#allocation8 + $0x18] sm:$0xf]
    %v577 = vld [vmem:[#allocation8 + $0x1c] sm:$0xf]
    %v578 = vld [vmem:[#allocation8 + $0x20] sm:$0xf]
    %v579 = vld [vmem:[#allocation8 + $0x24] sm:$0xf]
    %v580 = vld [vmem:[#allocation8 + $0x28] sm:$0xf]
    %v581 = vld [vmem:[#allocation8 + $0x2c] sm:$0xf]
    %v582 = vld [vmem:[#allocation8 + $0x30] sm:$0xf]
    %v583 = vld [vmem:[#allocation8 + $0x34] sm:$0xf]
    %v584 = vld [vmem:[#allocation8 + $0x38] sm:$0xf]
    %v585 = vld [vmem:[#allocation8 + $0x3c] sm:$0xf]
    %v586 = vld [vmem:[%s8] sm:$0x1]
    %v588 = vlaneseq
    %v589 = vshrl.u32 %v588, 7
    %v590 = vsub.s32 0, %v589
    %v591 = vrot.slane %v586, %v590
    %v609 = vunpack.c.l.b16 %v570
    %v610 = vunpack.c.l.b16 %v571
    %v611 = vunpack.c.l.b16 %v572
    %v612 = vunpack.c.l.b16 %v573
    %v613 = vunpack.c.l.b16 %v574
    %v614 = vunpack.c.l.b16 %v575
    %v615 = vunpack.c.l.b16 %v576
    %v616 = vunpack.c.l.b16 %v577
    %v617 = vunpack.c.l.b16 %v578
    %v618 = vunpack.c.l.b16 %v579
    %v619 = vunpack.c.l.b16 %v580
    %v620 = vunpack.c.l.b16 %v581
    %v621 = vunpack.c.l.b16 %v582
    %v622 = vunpack.c.l.b16 %v583
    %v623 = vunpack.c.l.b16 %v584
    %v624 = vunpack.c.l.b16 %v585
    %v625 = vpack.c.b16 %v610, %v609
    %v626 = vpack.c.b16 %v612, %v611
    %v627 = vpack.c.b16 %v614, %v613
    %v628 = vpack.c.b16 %v616, %v615
    %v629 = vpack.c.b16 %v618, %v617
    %v630 = vpack.c.b16 %v620, %v619
    %v631 = vpack.c.b16 %v622, %v621
    %v632 = vpack.c.b16 %v624, %v623
    %641 = vmatprep.subr.bf16.mxu0 0
    %642 = vmatpush1.bf16.msra.mxu0 %v625
    %643 = vmatprep.subr.bf16.mxu0 0
    %644 = vmatpush1.bf16.msra.mxu0 %v626
    %645 = vmatprep.subr.bf16.mxu0 0
    %646 = vmatpush1.bf16.msra.mxu0 %v627
    %647 = vmatprep.subr.bf16.mxu0 0
    %648 = vmatpush1.bf16.msra.mxu0 %v628
    %649 = vmatprep.subr.bf16.mxu0 0
    %650 = vmatpush1.bf16.msra.mxu0 %v629
    %651 = vmatprep.subr.bf16.mxu0 0
    %652 = vmatpush1.bf16.msra.mxu0 %v630
    %653 = vmatprep.subr.bf16.mxu0 0
    %654 = vmatpush1.bf16.msra.mxu0 %v631
    %655 = vmatprep.subr.bf16.mxu0 0
    %656 = vmatpush1.bf16.msra.mxu0 %v632
    %657 = vmatprep.subr.bf16.mxu0 0
    %658 = vmatpush1.bf16.msra.mxu0 0
    %659 = vmatprep.subr.bf16.mxu0 0
    %660 = vmatpush1.bf16.msra.mxu0 0
    %661 = vmatprep.subr.bf16.mxu0 0
    %662 = vmatpush1.bf16.msra.mxu0 0
    %663 = vmatprep.subr.bf16.mxu0 0
    %664 = vmatpush1.bf16.msra.mxu0 0
    %665 = vmatprep.subr.bf16.mxu0 0
    %666 = vmatpush1.bf16.msra.mxu0 0
    %667 = vmatprep.subr.bf16.mxu0 0
    %668 = vmatpush1.bf16.msra.mxu0 0
    %669 = vmatprep.subr.bf16.mxu0 0
    %670 = vmatpush1.bf16.msra.mxu0 0
    %671 = vmatprep.subr.bf16.mxu0 0
    %672 = vmatpush1.bf16.msra.mxu0 0
    %673 = vmatprep.mubr.bf16.mxu0 0
    %674 = vmatmul.mubr.bf16.gmra.mrb[0].mxu0 %v566
    %v675 = vpop.f32.mrb[0].mxu0
    %v676 = vadd.f32 %v591, %v675
    %v677 = vpop.f32.mrb[0].mxu0
    %v678 = vpop.f32.mrb[0].mxu0
    %v679 = vadd.f32 %v591, %v678
    %v680 = vpop.f32.mrb[0].mxu0
    %681 = vmatprep.mubr.bf16.mxu0 0
    %682 = vmatmul.mubr.bf16.gmra.mrb[0].mxu0 %v567
    %v683 = vpop.f32.mrb[0].mxu0
    %v684 = vadd.f32 %v591, %v683
    %v685 = vpop.f32.mrb[0].mxu0
    %v686 = vpop.f32.mrb[0].mxu0
    %v687 = vadd.f32 %v591, %v686
    %v688 = vpop.f32.mrb[0].mxu0
    %689 = vmatprep.mubr.bf16.mxu0 0
    %690 = vmatmul.mubr.bf16.gmra.mrb[0].mxu0 %v568
    %v691 = vpop.f32.mrb[0].mxu0
    %v692 = vadd.f32 %v591, %v691
    %v693 = vpop.f32.mrb[0].mxu0
    %v694 = vpop.f32.mrb[0].mxu0
    %v695 = vadd.f32 %v591, %v694
    %v696 = vpop.f32.mrb[0].mxu0
    %697 = vmatprep.mubr.bf16.mxu0 0
    %698 = vmatmul.mubr.bf16.gmra.mrb[0].mxu0 %v569
    %v699 = vpop.f32.mrb[0].mxu0
    %v700 = vadd.f32 %v591, %v699
    %v701 = vpop.f32.mrb[0].mxu0
    %v702 = vpop.f32.mrb[0].mxu0
    %v703 = vadd.f32 %v591, %v702
    %v704 = vpop.f32.mrb[0].mxu0
    %705 = vdwg.mxu0
    %706 = vst [vmem:[#allocation10] sm:$0xff] %v676
    %707 = vst [vmem:[#allocation10 + $0x8] sm:$0xff] %v679
    %708 = vst [vmem:[#allocation10 + $0x10] sm:$0xff] %v684
    %709 = vst [vmem:[#allocation10 + $0x18] sm:$0xff] %v687
    %710 = vst [vmem:[#allocation10 + $0x20] sm:$0xff] %v692
    %711 = vst [vmem:[#allocation10 + $0x28] sm:$0xff] %v695
    %712 = vst [vmem:[#allocation10 + $0x30] sm:$0xff] %v700
    %713 = vst [vmem:[#allocation10 + $0x38] sm:$0xff] %v703
    // Predicated region
    $region54: #{tpu_custom_call.1} parent=1 // pred_check
      _
    $region55: #{tpu_custom_call.1} parent=1 // pred_check_branch
      %715 = sbr.rel (0) target = $region57
    $region56: #{tpu_custom_call.1} parent=1 // pred_region
      %s717 = ssub.s32 1024, 1024
      %718 = vsyncadd [#allocation4], %s717
      %s719 = sshll.u32 [#allocation10], 4
      %s720 = int_to_ptr.vmem [resolvable:$true] %s719
      %725 = dma.vmem_to_hbm [thread:$0]  %s720, 1024, %s9, [#allocation4], 128, 128, 8
    $region57: #{tpu_custom_call.1} parent=1 // pred_fallthru
      _
    // Predicated region
    $region58: #{tpu_custom_call.1} parent=1 // pred_check
      _
    $region59: #{tpu_custom_call.1} parent=1 // pred_check_branch
      %727 = sbr.rel (0) target = $region61
    $region60: #{tpu_custom_call.1} parent=1 // pred_region
      %728 = dma.done [#allocation4], 1024
    $region61: #{tpu_custom_call.1} parent=1 // pred_fallthru
      _
    %729 = vsyncpa [#allocation3], 1
    %730 = vsyncpa [#allocation6], 1
    %731 = vsyncpa [#allocation9], 1
    %732 = vsyncpa [#allocation4], 1

</llo_original>
